<compile_context>
chip_gen: v7x
topology: tpu7x:2x2x1
jax: 0.10.0
libtpu: 0.0.40
codegen_flags: <defaults>
</compile_context>

<pallas_src>
import functools

import jax
import jax.numpy as jnp
from jax.experimental import pallas as pl
from jax.experimental.pallas import tpu as pltpu


def _round_up(x: int, m: int) -> int:
    return (x + m - 1) // m * m


def _largest_divisor_leq(n: int, cap: int) -> int:
    best = 1
    for d in range(1, n + 1):
        if n % d == 0 and d <= cap:
            best = d
    return best


def _choose_tiling(n: int, c: int, s: int, dtype_bytes: int):
    """Pick (BN, S_TILE): 128-aligned lane tile, ~4 MiB input blocks."""
    target_bytes = 4 * 1024 * 1024  # per input block; 2x-buffered it stays well
    # under v7x's 64 MiB VMEM and the scoped limits we request below.
    s128 = _round_up(s, 128)
    # Largest S tile (multiple of 128) so a single-image (1, C, S_TILE) block fits.
    max_s_tile = max(128, (target_bytes // max(1, c * dtype_bytes)) // 128 * 128)
    s_tile = min(s128, max_s_tile)
    s_tile = max(128, (s_tile // 128) * 128)
    # Batch images per grid step when C*S_TILE alone is tiny (amortize per-step cost).
    per_image_bytes = c * s_tile * dtype_bytes
    bn_cap = max(1, target_bytes // per_image_bytes)
    bn = _largest_divisor_leq(n, bn_cap)
    return bn, s_tile


def _channel_pool_kernel(x_ref, o_ref, *, types: str, inv_c: float):
    xv = x_ref[...]  # (BN, C, S_TILE) block in VMEM
    if types == "avg":
        red = jnp.sum(xv.astype(jnp.float32), axis=1, keepdims=True) * inv_c
    else:
        red = jnp.max(xv, axis=1, keepdims=True)
    o_ref[...] = red.astype(o_ref.dtype)


def channel_pool(x, types: str = "avg"):
    """ChannelPool forward: reduce (mean or max) over the channel axis of NCHW.

    Args:
      x: (N, C, W, H) array.
      types: 'avg' or 'max'.
    Returns:
      (N, 1, W, H) array, same dtype as x.
    """
    if types not in ("avg", "max"):
        raise Exception("inner error")

    n, c, w, h = x.shape
    s = w * h
    dtype_bytes = jnp.dtype(x.dtype).itemsize

    bn, s_tile = _choose_tiling(n, c, s, dtype_bytes)
    s_pad = _round_up(s, s_tile)

    xr = x.reshape(n, c, s)  # glue reshape; reduction itself happens in the kernel
    if s_pad != s:
        # Padding is only along S (never along C), so padded lanes never enter the
        # channel reduction; they are sliced off after the call.
        xr = jnp.pad(xr, ((0, 0), (0, 0), (0, s_pad - s)))

    grid = (n // bn, s_pad // s_tile)

    in_block_bytes = bn * c * s_tile * dtype_bytes
    out_block_bytes = bn * 1 * s_tile * dtype_bytes
    vmem_need = 2 * in_block_bytes + 2 * out_block_bytes + (2 << 20)
    vmem_limit = int(min(64 << 20, max(vmem_need, 32 << 20)))

    kernel = functools.partial(
        _channel_pool_kernel, types=types, inv_c=float(1.0 / c)
    )

    out = pl.pallas_call(
        kernel,
        out_shape=jax.ShapeDtypeStruct((n, 1, s_pad), x.dtype),
        grid=grid,
        in_specs=[pl.BlockSpec((bn, c, s_tile), lambda i, j: (i, 0, j))],
        out_specs=pl.BlockSpec((bn, 1, s_tile), lambda i, j: (i, 0, j)),
        compiler_params=pltpu.CompilerParams(
            dimension_semantics=("parallel", "parallel"),
            vmem_limit_bytes=vmem_limit,
        ),
    )(xr)

    if s_pad != s:
        out = out[:, :, :s]
    return out.reshape(n, 1, w, h)


if __name__ == "__main__":
    key = jax.random.PRNGKey(0)

    # Small shapes consistent with the module's NCHW forward.
    N, C, W, H = 2, 4, 16, 16
    x = jax.random.normal(key, (N, C, W, H), dtype=jnp.float32)

    # 'avg' variant
    y_avg = channel_pool(x, types="avg")
    y_avg = jax.block_until_ready(y_avg)
    ref_avg = jnp.mean(x, axis=1, keepdims=True)
    assert y_avg.shape == (N, 1, W, H)
    assert jnp.allclose(y_avg, ref_avg, atol=1e-5, rtol=1e-5)

    # 'max' variant
    y_max = channel_pool(x, types="max")
    y_max = jax.block_until_ready(y_max)
    ref_max = jnp.max(x, axis=1, keepdims=True)
    assert y_max.shape == (N, 1, W, H)
    assert jnp.allclose(y_max, ref_max, atol=1e-6, rtol=1e-6)

    # Non-128-aligned spatial shape to exercise the lane-padding/slicing path.
    key2 = jax.random.PRNGKey(1)
    x2 = jax.random.normal(key2, (2, 4, 10, 13), dtype=jnp.float32)
    y2_avg = jax.block_until_ready(channel_pool(x2, types="avg"))
    y2_max = jax.block_until_ready(channel_pool(x2, types="max"))
    assert y2_avg.shape == (2, 1, 10, 13)
    assert jnp.allclose(y2_avg, jnp.mean(x2, axis=1, keepdims=True), atol=1e-5, rtol=1e-5)
    assert jnp.allclose(y2_max, jnp.max(x2, axis=1, keepdims=True), atol=1e-6, rtol=1e-6)

    print("KERNEL_OK")
</pallas_src>

<mosaic_0001>
module attributes {stable_mosaic.version = 11 : i64} {
  func.func @_channel_pool_kernel(%arg0: i32, %arg1: i32, %arg2: memref<2x4x256xf32, #tpu.memory_space<vmem>>, %arg3: memref<2x1x256xf32, #tpu.memory_space<vmem>>) attributes {dimension_semantics = [#tpu.dimension_semantics<parallel>, #tpu.dimension_semantics<parallel>], iteration_bounds = array<i64: 1, 1>, scalar_prefetch = 0 : i64, scratch_operands = 0 : i64, tpu.core_type = #tpu.core_type<tc>, window_params = [{transform_indices = @transform_0, window_bounds = array<i64: 2, 4, 256>}, {transform_indices = @transform_1, window_bounds = array<i64: 2, 1, 256>}]} {
    %c0 = arith.constant 0 : index
    %c0_0 = arith.constant 0 : index
    %c0_1 = arith.constant 0 : index
    %0 = vector.load %arg2[%c0, %c0_0, %c0_1] : memref<2x4x256xf32, #tpu.memory_space<vmem>>, vector<2x4x256xf32>
    %cst = arith.constant dense<0.000000e+00> : vector<2x256xf32>
    %1 = vector.multi_reduction <add>, %0, %cst [1] : vector<2x4x256xf32> to vector<2x256xf32>
    %2 = vector.shape_cast %1 : vector<2x256xf32> to vector<2x1x256xf32>
    %cst_2 = arith.constant 2.500000e-01 : f32
    %3 = vector.broadcast %cst_2 : f32 to vector<2x1x256xf32>
    %4 = arith.mulf %2, %3 : vector<2x1x256xf32>
    %c0_3 = arith.constant 0 : index
    %c0_4 = arith.constant 0 : index
    %c0_5 = arith.constant 0 : index
    %5 = vector.load %arg3[%c0_3, %c0_4, %c0_5] : memref<2x1x256xf32, #tpu.memory_space<vmem>>, vector<2x1x256xf32>
    tpu.vector_store %arg3[%c0_3, %c0_4, %c0_5], %4 {strides = array<i32>} : memref<2x1x256xf32, #tpu.memory_space<vmem>>, vector<2x1x256xf32>,
    return
  }
  func.func @transform_0(%arg0: i32, %arg1: i32) -> (i32, i32, i32) {
    %c0_i32 = arith.constant 0 : i32
    %c0_i32_0 = arith.constant 0 : i32
    return %arg0, %c0_i32, %arg1 : i32, i32, i32
  }
  func.func @transform_1(%arg0: i32, %arg1: i32) -> (i32, i32, i32) {
    %c0_i32 = arith.constant 0 : i32
    %c0_i32_0 = arith.constant 0 : i32
    return %arg0, %c0_i32, %arg1 : i32, i32, i32
  }
}

</mosaic_0001>

<llo_original>
// kernel: tpu_custom_call.1
$region0: #{tpu_custom_call.1}
  #allocation0 [shape = 'u32[]', space=smem, size = 0x4, offset = 0x4, fixed_abs, tag = 'smem constant byte address 0x4 - core index']
  #allocation1 [shape = 'u32[144,128]{1,0:T(1,128)}', space=vmem, size = 0x12000, scoped, tag = 'internal scratch']
  %s0 = inlined_call_operand.hbm [shape: f32[2,4,256], index: 0, kind: input, shape index: {}]
  %s1 = inlined_call_operand.hbm [shape: f32[2,1,256], index: 1, kind: output, shape index: {}]
  %s2 = sld [smem:[#allocation0]]
  $region18: #{tpu_custom_call.1} parent=0
    _
  %s4 = ssub.s32 1, %s2
  %s5 = scalar_select 0, %s4, %s2
  $region1: #{tpu_custom_call.1} parent=0
    #allocation2 [shape = 'u8[8192]{0}', space=vmem, size = 0x2000, scoped, tag = 'input window, operand 0, single buffered']
    #allocation3 [shape = 's32[1]{0}', space=sflag, size = 0x4, scoped, tag = 'scoped memory for tpu_custom_call.1']
    #allocation4 [shape = 's32[1]{0}', space=sflag, size = 0x4, scoped, tag = 'scoped memory for tpu_custom_call.1']
    #allocation5 [shape = 'u8[2048]{0}', space=vmem, size = 0x800, scoped, tag = 'output window, operand 0, single buffered']
    %6 = vsyncpa [#allocation3], 0
    %7 = vsyncpa [#allocation4], 0
    // Predicated region
    $region2: #{tpu_custom_call.1} parent=1 // pred_check
      _
    $region3: #{tpu_custom_call.1} parent=1 // pred_check_branch
      %9 = sbr.rel (0) target = $region5
    $region4: #{tpu_custom_call.1} parent=1 // pred_region
      %s11 = ssub.s32 256, 256
      %12 = vsyncadd [#allocation3], %s11
      %s13 = sshll.u32 [#allocation2], 4
      %s14 = int_to_ptr.vmem [resolvable:$true] %s13
      %19 = dma.hbm_to_vmem [thread:$0]  %s0, 256, %s14, [#allocation3], 128, 128, 8
    $region5: #{tpu_custom_call.1} parent=1 // pred_fallthru
      _
    // Predicated region
    $region6: #{tpu_custom_call.1} parent=1 // pred_check
      _
    $region7: #{tpu_custom_call.1} parent=1 // pred_check_branch
      %21 = sbr.rel (0) target = $region9
    $region8: #{tpu_custom_call.1} parent=1 // pred_region
      %22 = dma.done [#allocation3], 256
    $region9: #{tpu_custom_call.1} parent=1 // pred_fallthru
      _
    %v23 = vld [vmem:[#allocation2] sm:$0xff]
    %v24 = vld [vmem:[#allocation2 + $0x8] sm:$0xff]
    %v27 = vcombine.high %v23, %v23
    %v28 = vcombine.high %v24, %v24
    %vm31 = vcmask 1043456
    %v32 = vsel %vm31, %v23, 0.0
    %v33 = vrot.slane %v32, 4
    %v34 = vadd.f32 %v32, %v33
    %v35 = vrot.slane %v34, 2
    %v36 = vadd.f32 %v34, %v35
    %v37 = vrot.slane %v36, 1
    %v38 = vadd.f32 %v36, %v37
    %v39 = vsel %vm31, %v27, 0.0
    %v40 = vrot.slane %v39, 4
    %v41 = vadd.f32 %v39, %v40
    %v42 = vrot.slane %v41, 2
    %v43 = vadd.f32 %v41, %v42
    %v44 = vrot.slane %v43, 1
    %v45 = vadd.f32 %v43, %v44
    %v46 = vsel %vm31, %v24, 0.0
    %v47 = vrot.slane %v46, 4
    %v48 = vadd.f32 %v46, %v47
    %v49 = vrot.slane %v48, 2
    %v50 = vadd.f32 %v48, %v49
    %v51 = vrot.slane %v50, 1
    %v52 = vadd.f32 %v50, %v51
    %v53 = vsel %vm31, %v28, 0.0
    %v54 = vrot.slane %v53, 4
    %v55 = vadd.f32 %v53, %v54
    %v56 = vrot.slane %v55, 2
    %v57 = vadd.f32 %v55, %v56
    %v58 = vrot.slane %v57, 1
    %v59 = vadd.f32 %v57, %v58
    %v60 = vmul.f32 %v38, 0.25
    %v61 = vmul.f32 %v45, 0.25
    %v62 = vmul.f32 %v52, 0.25
    %v63 = vmul.f32 %v59, 0.25
    %v68 = vcombine.low %v60, %v61
    %v70 = vunpack.c.l.s4 1966171168
    %v71 = vunpack.c.0.s8 %v70
    %v72 = vlaneseq
    %v73 = vshrl.u32 %v72, 7
    %v74 = vsub.s32 %v71, %v73
    %v75 = vrot.slane %v68, %v74
    %v77 = vunpack.c.l.s4 1966171168
    %v78 = vunpack.c.0.s8 %v77
    %v79 = vlaneseq
    %v80 = vshrl.u32 %v79, 7
    %v81 = vsub.s32 %v78, %v80
    %v82 = vrot.slane %v75, %v81
    %v83 = vcombine.low %v62, %v63
    %v85 = vunpack.c.l.s4 1966171168
    %v86 = vunpack.c.0.s8 %v85
    %v87 = vlaneseq
    %v88 = vshrl.u32 %v87, 7
    %v89 = vsub.s32 %v86, %v88
    %v90 = vrot.slane %v83, %v89
    %v92 = vunpack.c.l.s4 1966171168
    %v93 = vunpack.c.0.s8 %v92
    %v94 = vlaneseq
    %v95 = vshrl.u32 %v94, 7
    %v96 = vsub.s32 %v93, %v95
    %v97 = vrot.slane %v90, %v96
    %v100 = vlaneseq
    %vm101 = vcmp.ge.s32.totalorder %v100, 0
    %vm102 = vcmp.lt.s32.totalorder %v100, 256
    %vm103 = vmand %vm101, %vm102
    %104 = vst.msk [vmem:[#allocation5] sm:$0x3] %vm103, %v82
    %105 = vst.msk [vmem:[#allocation5 + $0x2] sm:$0x3] %vm103, %v97
    // Predicated region
    $region10: #{tpu_custom_call.1} parent=1 // pred_check
      _
    $region11: #{tpu_custom_call.1} parent=1 // pred_check_branch
      %107 = sbr.rel (0) target = $region13
    $region12: #{tpu_custom_call.1} parent=1 // pred_region
      %s109 = ssub.s32 64, 64
      %110 = vsyncadd [#allocation4], %s109
      %s111 = sshll.u32 [#allocation5], 4
      %s112 = int_to_ptr.vmem [resolvable:$true] %s111
      %117 = dma.vmem_to_hbm [thread:$0]  %s112, 64, %s1, [#allocation4], 32, 32, 2
    $region13: #{tpu_custom_call.1} parent=1 // pred_fallthru
      _
    // Predicated region
    $region14: #{tpu_custom_call.1} parent=1 // pred_check
      _
    $region15: #{tpu_custom_call.1} parent=1 // pred_check_branch
      %119 = sbr.rel (0) target = $region17
    $region16: #{tpu_custom_call.1} parent=1 // pred_region
      %120 = dma.done [#allocation4], 64
    $region17: #{tpu_custom_call.1} parent=1 // pred_fallthru
      _
    %121 = vsyncpa [#allocation3], 1
    %122 = vsyncpa [#allocation4], 1

</llo_original>
